<compile_context>
chip_gen: v7x
topology: tpu7x:2x2x1
jax: 0.10.0
libtpu: 0.0.40
codegen_flags: <defaults>
</compile_context>

<pallas_src>
import jax
import jax.numpy as jnp
from jax.experimental import pallas as pl
from jax.experimental.pallas import tpu as pltpu


def _make_mlcab_kernel(*, chunk1, s1_size, chunk2, s2_size, s3_size, h3, w3, num_chunks):
    """Builds the fused kernel body for fixed static geometry."""

    def kernel(s1_ref, s2_ref, s3_ref, out_ref, mx1_ref, sm1_ref, mx2_ref, sm2_ref):
        # Grid: (batch_blocks [parallel], spatial_chunks [arbitrary / reduction]).
        # s3/out blocks have a constant index over the chunk axis, so they stay resident
        # in VMEM and the output is flushed once per batch block.
        k = pl.program_id(1)

        @pl.when(k == 0)
        def _init():
            mx1_ref[...] = jnp.full_like(mx1_ref, -jnp.inf)
            sm1_ref[...] = jnp.zeros_like(sm1_ref)
            mx2_ref[...] = jnp.full_like(mx2_ref, -jnp.inf)
            sm2_ref[...] = jnp.zeros_like(sm2_ref)

        def _accumulate(x_ref, mx_ref, sm_ref, chunk, total):
            # Skip chunks lying entirely past this branch's spatial extent (its block
            # index is clamped in the index_map, so no extra DMA happens either).
            @pl.when(k * chunk < total)
            def _():
                x = x_ref[...].astype(jnp.float32)                       # (TB, C, chunk)
                if total % chunk != 0:
                    # Ragged tail chunk: mask padded lanes out of max and sum.
                    idx = jax.lax.broadcasted_iota(jnp.int32, x.shape, 2) + k * chunk
                    valid = idx < total
                    x_max = jnp.where(valid, x, -jnp.inf)
                    x_sum = jnp.where(valid, x, 0.0)
                else:
                    x_max = x
                    x_sum = x
                mx_ref[...] = jnp.maximum(mx_ref[...],
                                          jnp.max(x_max, axis=2, keepdims=True))
                sm_ref[...] = sm_ref[...] + jnp.sum(x_sum, axis=2, keepdims=True)

        _accumulate(s1_ref, mx1_ref, sm1_ref, chunk1, s1_size)
        _accumulate(s2_ref, mx2_ref, sm2_ref, chunk2, s2_size)

        @pl.when(k == num_chunks - 1)
        def _finalize():
            tb = out_ref.shape[0]
            c = out_ref.shape[1]

            # (global max + global mean) / 2 channel descriptors, exact f32.
            p1 = 0.5 * (mx1_ref[...] + sm1_ref[...] * (1.0 / s1_size))   # (TB, C, 1)
            p2 = 0.5 * (mx2_ref[...] + sm2_ref[...] * (1.0 / s2_size))
            x3 = s3_ref[...].astype(jnp.float32)                         # (TB, C, S3)
            p3 = 0.5 * (jnp.max(x3, axis=2, keepdims=True)
                        + jnp.sum(x3, axis=2, keepdims=True) * (1.0 / s3_size))

            # att[t, c, h] = sum_b p_b[t, c] * p_b[t, h]; the bilinear upsample to
            # (H3, W3) is identity along H (H3 == C) and a broadcast along W, so build
            # the W-repeated attention directly in the lane-dense (TB, C, H3*W3) layout:
            # per output row h, a tiny (TB, C, 1) column broadcast to W3 lanes, then one
            # lane-axis concatenate.  All exact f32 VPU/data-movement ops, no matmul.
            cols = []
            for h in range(h3):
                a_h = (p1 * p1[:, h:h + 1, :]
                       + p2 * p2[:, h:h + 1, :]
                       + p3 * p3[:, h:h + 1, :])                          # (TB, C, 1)
                cols.append(jnp.broadcast_to(a_h, (tb, c, w3)))           # (TB, C, W3)
            att_rep = jnp.concatenate(cols, axis=2)                       # (TB, C, H3*W3)

            out_ref[...] = (x3 * att_rep).astype(out_ref.dtype)

    return kernel


def _largest_divisor_leq(n, cap):
    cap = max(1, min(cap, n))
    for d in range(cap, 0, -1):
        if n % d == 0:
            return d
    return 1


def mlcab_forward(s1, s2, s3, *, max_chunk=2048, batch_block=None,
                  vmem_block_budget_bytes=12 * 1024 * 1024):
    """MLCAB forward (NCHW in, NCHW out): out = s3 * (att1_up + att2_up + att3)."""
    n, c, h1, w1 = s1.shape
    n2, c2, h2, w2 = s2.shape
    n3, c3, h3, w3 = s3.shape
    if not (n == n2 == n3 and c == c2 == c3):
        raise ValueError("s1/s2/s3 must share batch and channel dimensions")
    if h3 != c:
        # This is the module's own broadcasting requirement (att_s3 of shape (N,C,C,1)
        # must broadcast against (N,C,H3,W3)), not a kernel limitation.
        raise ValueError(f"MLCAB requires s3 height == channel count (H3={h3}, C={c})")

    s1_size, s2_size, s3_size = h1 * w1, h2 * w2, h3 * w3

    # Lane-dense layouts: flatten spatial dims in the wrapper (free reshapes) so every
    # block's trailing dim is the full flattened extent or a 128-multiple chunk of it.
    s1f = s1.reshape(n, c, s1_size)
    s2f = s2.reshape(n, c, s2_size)
    s3f = s3.reshape(n, c, s3_size)

    # Spatial chunking of the pool-only inputs bounds the double-buffered VMEM footprint
    # (v7x: 64 MiB physical / 32 MiB scoped default; v5e: 16 MiB scoped default).
    max_chunk = max(128, (int(max_chunk) // 128) * 128)
    chunk1 = s1_size if s1_size <= max_chunk else max_chunk
    chunk2 = s2_size if s2_size <= max_chunk else max_chunk
    nch1 = (s1_size + chunk1 - 1) // chunk1
    nch2 = (s2_size + chunk2 - 1) // chunk2
    num_chunks = max(nch1, nch2)

    # Batch blocking: amortize the ~0.35us/step grid overhead with TB batch elements per
    # step, sized against the double-buffered VMEM budget and keeping >= 2 parallel grid
    # iterations when N >= 2 so both v7x TensorCores stay busy.
    bytes_per_elem = c * (chunk1 * s1.dtype.itemsize
                          + chunk2 * s2.dtype.itemsize
                          + s3_size * 2 * s3.dtype.itemsize)
    if batch_block is None:
        cap_budget = max(1, vmem_block_budget_bytes // max(1, 2 * bytes_per_elem))
        cap_parallel = n // 2 if n >= 2 else 1
        tb = _largest_divisor_leq(n, min(cap_budget, cap_parallel))
    else:
        tb = int(batch_block)
        if n % tb != 0:
            raise ValueError("batch_block must divide the batch size")
    num_batch_blocks = n // tb

    def _chunk_index_map(nch):
        last = nch - 1
        if last == 0:
            return lambda i, k: (i, 0, 0)
        # Clamp so branches that finish early keep re-pointing at their last chunk
        # (same block index => no re-DMA); the kernel guards off their accumulation.
        return lambda i, k: (i, 0, jnp.minimum(k, last))

    kernel = _make_mlcab_kernel(
        chunk1=chunk1, s1_size=s1_size, chunk2=chunk2, s2_size=s2_size,
        s3_size=s3_size, h3=h3, w3=w3, num_chunks=num_chunks)

    block_bytes = tb * bytes_per_elem
    vmem_limit = int(min(64 * 1024 * 1024,
                         max(16 * 1024 * 1024, 2 * block_bytes + 8 * 1024 * 1024)))

    total_bytes = (s1f.size * s1.dtype.itemsize + s2f.size * s2.dtype.itemsize
                   + 2 * s3f.size * s3.dtype.itemsize)
    flops = 2 * (s1f.size + s2f.size + s3f.size) + n * (6 * c * c + 2 * c * s3_size)
    cost = pl.CostEstimate(flops=int(flops), transcendentals=0,
                           bytes_accessed=int(total_bytes))

    out_flat = pl.pallas_call(
        kernel,
        out_shape=jax.ShapeDtypeStruct((n, c, s3_size), s3.dtype),
        grid_spec=pltpu.PrefetchScalarGridSpec(
            num_scalar_prefetch=0,
            grid=(num_batch_blocks, num_chunks),
            in_specs=[
                pl.BlockSpec((tb, c, chunk1), _chunk_index_map(nch1)),
                pl.BlockSpec((tb, c, chunk2), _chunk_index_map(nch2)),
                pl.BlockSpec((tb, c, s3_size), lambda i, k: (i, 0, 0)),
            ],
            out_specs=pl.BlockSpec((tb, c, s3_size), lambda i, k: (i, 0, 0)),
            scratch_shapes=[
                pltpu.VMEM((tb, c, 1), jnp.float32),   # running max, s1
                pltpu.VMEM((tb, c, 1), jnp.float32),   # running sum, s1
                pltpu.VMEM((tb, c, 1), jnp.float32),   # running max, s2
                pltpu.VMEM((tb, c, 1), jnp.float32),   # running sum, s2
            ],
        ),
        compiler_params=pltpu.CompilerParams(
            dimension_semantics=("parallel", "arbitrary"),
            vmem_limit_bytes=vmem_limit,
        ),
        cost_estimate=cost,
    )(s1f, s2f, s3f)

    return out_flat.reshape(n, c, h3, w3)


# ----------------------------- pure-JAX reference -----------------------------------
def mlcab_ref(s1, s2, s3):
    def branch(x):
        mx = jnp.max(x, axis=(2, 3), keepdims=True)
        av = jnp.mean(x, axis=(2, 3), keepdims=True)
        p = 0.5 * (mx + av)                           # (N, C, 1, 1)
        return jnp.swapaxes(p, 1, 2) * p              # (N, C, C, 1) outer product

    a1, a2, a3 = branch(s1), branch(s2), branch(s3)
    n, c, h3, w3 = s3.shape
    up = lambda a: jax.image.resize(
        a, (n, c, h3, w3), method="bilinear", precision=jax.lax.Precision.HIGHEST
    )
    att = up(a1) + up(a2) + a3                        # a3 broadcasts over W (H3 == C)
    return s3 * att


if __name__ == "__main__":
    key = jax.random.PRNGKey(0)
    keys = jax.random.split(key, 9)

    def run_and_check(s1, s2, s3, **kwargs):
        out = jax.block_until_ready(mlcab_forward(s1, s2, s3, **kwargs))
        ref = mlcab_ref(s1, s2, s3)
        assert out.shape == s3.shape
        err = float(jnp.max(jnp.abs(out - ref)))
        assert jnp.allclose(out, ref, rtol=1e-4, atol=1e-4), f"max abs err {err}"

    # Feature-pyramid-style inputs; H3 == C as the module's own broadcasting requires.
    # 1) default path: single spatial chunk per branch, TB=1, 2 parallel grid steps.
    run_and_check(jax.random.normal(keys[0], (2, 8, 32, 32), jnp.float32),
                  jax.random.normal(keys[1], (2, 8, 16, 16), jnp.float32),
                  jax.random.normal(keys[2], (2, 8, 8, 8), jnp.float32))

    # 2) batch-blocked path: N=4 -> TB=2 batch elements per grid step.
    run_and_check(jax.random.normal(keys[3], (4, 8, 32, 32), jnp.float32),
                  jax.random.normal(keys[4], (4, 8, 16, 16), jnp.float32),
                  jax.random.normal(keys[5], (4, 8, 8, 8), jnp.float32))

    # 3) chunked-pooling path (as used for large pyramids on v7x): s1 is split into
    #    four 256-wide chunks with a masked ragged tail; s2 finishes after one chunk
    #    and its block index is clamped / accumulation guarded for the remaining steps.
    run_and_check(jax.random.normal(keys[6], (2, 8, 30, 30), jnp.float32),
                  jax.random.normal(keys[7], (2, 8, 16, 16), jnp.float32),
                  jax.random.normal(keys[8], (2, 8, 8, 8), jnp.float32),
                  max_chunk=256)

    print("KERNEL_OK")
</pallas_src>

<mosaic_0001>
module attributes {stable_mosaic.version = 11 : i64} {
  func.func @kernel(%arg0: i32, %arg1: i32, %arg2: memref<1x8x1024xf32, #tpu.memory_space<vmem>>, %arg3: memref<1x8x256xf32, #tpu.memory_space<vmem>>, %arg4: memref<1x8x64xf32, #tpu.memory_space<vmem>>, %arg5: memref<1x8x64xf32, #tpu.memory_space<vmem>>, %arg6: memref<1x8x1xf32, #tpu.memory_space<vmem>>, %arg7: memref<1x8x1xf32, #tpu.memory_space<vmem>>, %arg8: memref<1x8x1xf32, #tpu.memory_space<vmem>>, %arg9: memref<1x8x1xf32, #tpu.memory_space<vmem>>) attributes {dimension_semantics = [#tpu.dimension_semantics<parallel>, #tpu.dimension_semantics<arbitrary>], iteration_bounds = array<i64: 2, 1>, scalar_prefetch = 0 : i64, scratch_operands = 4 : i64, tpu.core_type = #tpu.core_type<tc>, window_params = [{transform_indices = @transform_0, window_bounds = array<i64: 1, 8, 1024>}, {transform_indices = @transform_1, window_bounds = array<i64: 1, 8, 256>}, {transform_indices = @transform_2, window_bounds = array<i64: 1, 8, 64>}, {transform_indices = @transform_3, window_bounds = array<i64: 1, 8, 64>}]} {
    %c0_i32 = arith.constant 0 : i32
    %0 = arith.cmpi eq, %arg1, %c0_i32 : i32
    %1 = arith.extui %0 : i1 to i32
    %c0_i32_0 = arith.constant 0 : i32
    %2 = arith.cmpi ne, %1, %c0_i32_0 : i32
    scf.if %2 {
      %cst = arith.constant 0xFF800000 : f32
      %14 = vector.broadcast %cst : f32 to vector<1x8x1xf32>
      %c0 = arith.constant 0 : index
      %c0_7 = arith.constant 0 : index
      %c0_8 = arith.constant 0 : index
      %15 = vector.load %arg6[%c0, %c0_7, %c0_8] : memref<1x8x1xf32, #tpu.memory_space<vmem>>, vector<1x8x1xf32>
      tpu.vector_store %arg6[%c0, %c0_7, %c0_8], %14 {strides = array<i32>} : memref<1x8x1xf32, #tpu.memory_space<vmem>>, vector<1x8x1xf32>,
      %cst_9 = arith.constant 0.000000e+00 : f32
      %16 = vector.broadcast %cst_9 : f32 to vector<1x8x1xf32>
      %c0_10 = arith.constant 0 : index
      %c0_11 = arith.constant 0 : index
      %c0_12 = arith.constant 0 : index
      %17 = vector.load %arg7[%c0_10, %c0_11, %c0_12] : memref<1x8x1xf32, #tpu.memory_space<vmem>>, vector<1x8x1xf32>
      tpu.vector_store %arg7[%c0_10, %c0_11, %c0_12], %16 {strides = array<i32>} : memref<1x8x1xf32, #tpu.memory_space<vmem>>, vector<1x8x1xf32>,
      %cst_13 = arith.constant 0xFF800000 : f32
      %18 = vector.broadcast %cst_13 : f32 to vector<1x8x1xf32>
      %c0_14 = arith.constant 0 : index
      %c0_15 = arith.constant 0 : index
      %c0_16 = arith.constant 0 : index
      %19 = vector.load %arg8[%c0_14, %c0_15, %c0_16] : memref<1x8x1xf32, #tpu.memory_space<vmem>>, vector<1x8x1xf32>
      tpu.vector_store %arg8[%c0_14, %c0_15, %c0_16], %18 {strides = array<i32>} : memref<1x8x1xf32, #tpu.memory_space<vmem>>, vector<1x8x1xf32>,
      %cst_17 = arith.constant 0.000000e+00 : f32
      %20 = vector.broadcast %cst_17 : f32 to vector<1x8x1xf32>
      %c0_18 = arith.constant 0 : index
      %c0_19 = arith.constant 0 : index
      %c0_20 = arith.constant 0 : index
      %21 = vector.load %arg9[%c0_18, %c0_19, %c0_20] : memref<1x8x1xf32, #tpu.memory_space<vmem>>, vector<1x8x1xf32>
      tpu.vector_store %arg9[%c0_18, %c0_19, %c0_20], %20 {strides = array<i32>} : memref<1x8x1xf32, #tpu.memory_space<vmem>>, vector<1x8x1xf32>,
    } else {
    }
    %c1024_i32 = arith.constant 1024 : i32
    %3 = arith.muli %arg1, %c1024_i32 : i32
    %c1024_i32_1 = arith.constant 1024 : i32
    %4 = arith.cmpi slt, %3, %c1024_i32_1 : i32
    %5 = arith.extui %4 : i1 to i32
    %c0_i32_2 = arith.constant 0 : i32
    %6 = arith.cmpi ne, %5, %c0_i32_2 : i32
    scf.if %6 {
      %c0 = arith.constant 0 : index
      %c0_7 = arith.constant 0 : index
      %c0_8 = arith.constant 0 : index
      %14 = vector.load %arg2[%c0, %c0_7, %c0_8] : memref<1x8x1024xf32, #tpu.memory_space<vmem>>, vector<1x8x1024xf32>
      %c0_9 = arith.constant 0 : index
      %c0_10 = arith.constant 0 : index
      %c0_11 = arith.constant 0 : index
      %15 = vector.load %arg6[%c0_9, %c0_10, %c0_11] : memref<1x8x1xf32, #tpu.memory_space<vmem>>, vector<1x8x1xf32>
      %cst = arith.constant dense<0xFF800000> : vector<1x8xf32>
      %16 = vector.multi_reduction <maximumf>, %14, %cst [2] : vector<1x8x1024xf32> to vector<1x8xf32>
      %17 = vector.shape_cast %16 : vector<1x8xf32> to vector<1x8x1xf32>
      %18 = arith.maximumf %15, %17 : vector<1x8x1xf32>
      %c0_12 = arith.constant 0 : index
      %c0_13 = arith.constant 0 : index
      %c0_14 = arith.constant 0 : index
      %19 = vector.load %arg6[%c0_12, %c0_13, %c0_14] : memref<1x8x1xf32, #tpu.memory_space<vmem>>, vector<1x8x1xf32>
      tpu.vector_store %arg6[%c0_12, %c0_13, %c0_14], %18 {strides = array<i32>} : memref<1x8x1xf32, #tpu.memory_space<vmem>>, vector<1x8x1xf32>,
      %c0_15 = arith.constant 0 : index
      %c0_16 = arith.constant 0 : index
      %c0_17 = arith.constant 0 : index
      %20 = vector.load %arg7[%c0_15, %c0_16, %c0_17] : memref<1x8x1xf32, #tpu.memory_space<vmem>>, vector<1x8x1xf32>
      %cst_18 = arith.constant dense<0.000000e+00> : vector<1x8xf32>
      %21 = vector.multi_reduction <add>, %14, %cst_18 [2] : vector<1x8x1024xf32> to vector<1x8xf32>
      %22 = vector.shape_cast %21 : vector<1x8xf32> to vector<1x8x1xf32>
      %23 = arith.addf %20, %22 : vector<1x8x1xf32>
      %c0_19 = arith.constant 0 : index
      %c0_20 = arith.constant 0 : index
      %c0_21 = arith.constant 0 : index
      %24 = vector.load %arg7[%c0_19, %c0_20, %c0_21] : memref<1x8x1xf32, #tpu.memory_space<vmem>>, vector<1x8x1xf32>
      tpu.vector_store %arg7[%c0_19, %c0_20, %c0_21], %23 {strides = array<i32>} : memref<1x8x1xf32, #tpu.memory_space<vmem>>, vector<1x8x1xf32>,
    } else {
    }
    %c256_i32 = arith.constant 256 : i32
    %7 = arith.muli %arg1, %c256_i32 : i32
    %c256_i32_3 = arith.constant 256 : i32
    %8 = arith.cmpi slt, %7, %c256_i32_3 : i32
    %9 = arith.extui %8 : i1 to i32
    %c0_i32_4 = arith.constant 0 : i32
    %10 = arith.cmpi ne, %9, %c0_i32_4 : i32
    scf.if %10 {
      %c0 = arith.constant 0 : index
      %c0_7 = arith.constant 0 : index
      %c0_8 = arith.constant 0 : index
      %14 = vector.load %arg3[%c0, %c0_7, %c0_8] : memref<1x8x256xf32, #tpu.memory_space<vmem>>, vector<1x8x256xf32>
      %c0_9 = arith.constant 0 : index
      %c0_10 = arith.constant 0 : index
      %c0_11 = arith.constant 0 : index
      %15 = vector.load %arg8[%c0_9, %c0_10, %c0_11] : memref<1x8x1xf32, #tpu.memory_space<vmem>>, vector<1x8x1xf32>
      %cst = arith.constant dense<0xFF800000> : vector<1x8xf32>
      %16 = vector.multi_reduction <maximumf>, %14, %cst [2] : vector<1x8x256xf32> to vector<1x8xf32>
      %17 = vector.shape_cast %16 : vector<1x8xf32> to vector<1x8x1xf32>
      %18 = arith.maximumf %15, %17 : vector<1x8x1xf32>
      %c0_12 = arith.constant 0 : index
      %c0_13 = arith.constant 0 : index
      %c0_14 = arith.constant 0 : index
      %19 = vector.load %arg8[%c0_12, %c0_13, %c0_14] : memref<1x8x1xf32, #tpu.memory_space<vmem>>, vector<1x8x1xf32>
      tpu.vector_store %arg8[%c0_12, %c0_13, %c0_14], %18 {strides = array<i32>} : memref<1x8x1xf32, #tpu.memory_space<vmem>>, vector<1x8x1xf32>,
      %c0_15 = arith.constant 0 : index
      %c0_16 = arith.constant 0 : index
      %c0_17 = arith.constant 0 : index
      %20 = vector.load %arg9[%c0_15, %c0_16, %c0_17] : memref<1x8x1xf32, #tpu.memory_space<vmem>>, vector<1x8x1xf32>
      %cst_18 = arith.constant dense<0.000000e+00> : vector<1x8xf32>
      %21 = vector.multi_reduction <add>, %14, %cst_18 [2] : vector<1x8x256xf32> to vector<1x8xf32>
      %22 = vector.shape_cast %21 : vector<1x8xf32> to vector<1x8x1xf32>
      %23 = arith.addf %20, %22 : vector<1x8x1xf32>
      %c0_19 = arith.constant 0 : index
      %c0_20 = arith.constant 0 : index
      %c0_21 = arith.constant 0 : index
      %24 = vector.load %arg9[%c0_19, %c0_20, %c0_21] : memref<1x8x1xf32, #tpu.memory_space<vmem>>, vector<1x8x1xf32>
      tpu.vector_store %arg9[%c0_19, %c0_20, %c0_21], %23 {strides = array<i32>} : memref<1x8x1xf32, #tpu.memory_space<vmem>>, vector<1x8x1xf32>,
    } else {
    }
    %c0_i32_5 = arith.constant 0 : i32
    %11 = arith.cmpi eq, %arg1, %c0_i32_5 : i32
    %12 = arith.extui %11 : i1 to i32
    %c0_i32_6 = arith.constant 0 : i32
    %13 = arith.cmpi ne, %12, %c0_i32_6 : i32
    scf.if %13 {
      %c0 = arith.constant 0 : index
      %c0_7 = arith.constant 0 : index
      %c0_8 = arith.constant 0 : index
      %14 = vector.load %arg6[%c0, %c0_7, %c0_8] : memref<1x8x1xf32, #tpu.memory_space<vmem>>, vector<1x8x1xf32>
      %c0_9 = arith.constant 0 : index
      %c0_10 = arith.constant 0 : index
      %c0_11 = arith.constant 0 : index
      %15 = vector.load %arg7[%c0_9, %c0_10, %c0_11] : memref<1x8x1xf32, #tpu.memory_space<vmem>>, vector<1x8x1xf32>
      %cst = arith.constant 9.765625E-4 : f32
      %16 = vector.broadcast %cst : f32 to vector<1x8x1xf32>
      %17 = arith.mulf %15, %16 : vector<1x8x1xf32>
      %18 = arith.addf %14, %17 : vector<1x8x1xf32>
      %cst_12 = arith.constant 5.000000e-01 : f32
      %19 = vector.broadcast %cst_12 : f32 to vector<1x8x1xf32>
      %20 = arith.mulf %19, %18 : vector<1x8x1xf32>
      %c0_13 = arith.constant 0 : index
      %c0_14 = arith.constant 0 : index
      %c0_15 = arith.constant 0 : index
      %21 = vector.load %arg8[%c0_13, %c0_14, %c0_15] : memref<1x8x1xf32, #tpu.memory_space<vmem>>, vector<1x8x1xf32>
      %c0_16 = arith.constant 0 : index
      %c0_17 = arith.constant 0 : index
      %c0_18 = arith.constant 0 : index
      %22 = vector.load %arg9[%c0_16, %c0_17, %c0_18] : memref<1x8x1xf32, #tpu.memory_space<vmem>>, vector<1x8x1xf32>
      %cst_19 = arith.constant 3.906250e-03 : f32
      %23 = vector.broadcast %cst_19 : f32 to vector<1x8x1xf32>
      %24 = arith.mulf %22, %23 : vector<1x8x1xf32>
      %25 = arith.addf %21, %24 : vector<1x8x1xf32>
      %cst_20 = arith.constant 5.000000e-01 : f32
      %26 = vector.broadcast %cst_20 : f32 to vector<1x8x1xf32>
      %27 = arith.mulf %26, %25 : vector<1x8x1xf32>
      %c0_21 = arith.constant 0 : index
      %c0_22 = arith.constant 0 : index
      %c0_23 = arith.constant 0 : index
      %28 = vector.load %arg4[%c0_21, %c0_22, %c0_23] : memref<1x8x64xf32, #tpu.memory_space<vmem>>, vector<1x8x64xf32>
      %cst_24 = arith.constant dense<0xFF800000> : vector<1x8xf32>
      %29 = vector.multi_reduction <maximumf>, %28, %cst_24 [2] : vector<1x8x64xf32> to vector<1x8xf32>
      %30 = vector.shape_cast %29 : vector<1x8xf32> to vector<1x8x1xf32>
      %cst_25 = arith.constant dense<0.000000e+00> : vector<1x8xf32>
      %31 = vector.multi_reduction <add>, %28, %cst_25 [2] : vector<1x8x64xf32> to vector<1x8xf32>
      %32 = vector.shape_cast %31 : vector<1x8xf32> to vector<1x8x1xf32>
      %cst_26 = arith.constant 1.562500e-02 : f32
      %33 = vector.broadcast %cst_26 : f32 to vector<1x8x1xf32>
      %34 = arith.mulf %32, %33 : vector<1x8x1xf32>
      %35 = arith.addf %30, %34 : vector<1x8x1xf32>
      %cst_27 = arith.constant 5.000000e-01 : f32
      %36 = vector.broadcast %cst_27 : f32 to vector<1x8x1xf32>
      %37 = arith.mulf %36, %35 : vector<1x8x1xf32>
      %38 = vector.extract_strided_slice %20 {offsets = [0, 0, 0], sizes = [1, 1, 1], strides = [1, 1, 1]} : vector<1x8x1xf32> to vector<1x1x1xf32>
      %39 = vector.broadcast %38 : vector<1x1x1xf32> to vector<1x8x1xf32>
      %40 = arith.mulf %20, %39 : vector<1x8x1xf32>
      %41 = vector.extract_strided_slice %27 {offsets = [0, 0, 0], sizes = [1, 1, 1], strides = [1, 1, 1]} : vector<1x8x1xf32> to vector<1x1x1xf32>
      %42 = vector.broadcast %41 : vector<1x1x1xf32> to vector<1x8x1xf32>
      %43 = arith.mulf %27, %42 : vector<1x8x1xf32>
      %44 = arith.addf %40, %43 : vector<1x8x1xf32>
      %45 = vector.extract_strided_slice %37 {offsets = [0, 0, 0], sizes = [1, 1, 1], strides = [1, 1, 1]} : vector<1x8x1xf32> to vector<1x1x1xf32>
      %46 = vector.broadcast %45 : vector<1x1x1xf32> to vector<1x8x1xf32>
      %47 = arith.mulf %37, %46 : vector<1x8x1xf32>
      %48 = arith.addf %44, %47 : vector<1x8x1xf32>
      %49 = vector.shape_cast %48 : vector<1x8x1xf32> to vector<1x8x1xf32>
      %50 = vector.broadcast %49 : vector<1x8x1xf32> to vector<1x8x8xf32>
      %51 = vector.extract_strided_slice %20 {offsets = [0, 1, 0], sizes = [1, 1, 1], strides = [1, 1, 1]} : vector<1x8x1xf32> to vector<1x1x1xf32>
      %52 = vector.broadcast %51 : vector<1x1x1xf32> to vector<1x8x1xf32>
      %53 = arith.mulf %20, %52 : vector<1x8x1xf32>
      %54 = vector.extract_strided_slice %27 {offsets = [0, 1, 0], sizes = [1, 1, 1], strides = [1, 1, 1]} : vector<1x8x1xf32> to vector<1x1x1xf32>
      %55 = vector.broadcast %54 : vector<1x1x1xf32> to vector<1x8x1xf32>
      %56 = arith.mulf %27, %55 : vector<1x8x1xf32>
      %57 = arith.addf %53, %56 : vector<1x8x1xf32>
      %58 = vector.extract_strided_slice %37 {offsets = [0, 1, 0], sizes = [1, 1, 1], strides = [1, 1, 1]} : vector<1x8x1xf32> to vector<1x1x1xf32>
      %59 = vector.broadcast %58 : vector<1x1x1xf32> to vector<1x8x1xf32>
      %60 = arith.mulf %37, %59 : vector<1x8x1xf32>
      %61 = arith.addf %57, %60 : vector<1x8x1xf32>
      %62 = vector.shape_cast %61 : vector<1x8x1xf32> to vector<1x8x1xf32>
      %63 = vector.broadcast %62 : vector<1x8x1xf32> to vector<1x8x8xf32>
      %64 = vector.extract_strided_slice %20 {offsets = [0, 2, 0], sizes = [1, 1, 1], strides = [1, 1, 1]} : vector<1x8x1xf32> to vector<1x1x1xf32>
      %65 = vector.broadcast %64 : vector<1x1x1xf32> to vector<1x8x1xf32>
      %66 = arith.mulf %20, %65 : vector<1x8x1xf32>
      %67 = vector.extract_strided_slice %27 {offsets = [0, 2, 0], sizes = [1, 1, 1], strides = [1, 1, 1]} : vector<1x8x1xf32> to vector<1x1x1xf32>
      %68 = vector.broadcast %67 : vector<1x1x1xf32> to vector<1x8x1xf32>
      %69 = arith.mulf %27, %68 : vector<1x8x1xf32>
      %70 = arith.addf %66, %69 : vector<1x8x1xf32>
      %71 = vector.extract_strided_slice %37 {offsets = [0, 2, 0], sizes = [1, 1, 1], strides = [1, 1, 1]} : vector<1x8x1xf32> to vector<1x1x1xf32>
      %72 = vector.broadcast %71 : vector<1x1x1xf32> to vector<1x8x1xf32>
      %73 = arith.mulf %37, %72 : vector<1x8x1xf32>
      %74 = arith.addf %70, %73 : vector<1x8x1xf32>
      %75 = vector.shape_cast %74 : vector<1x8x1xf32> to vector<1x8x1xf32>
      %76 = vector.broadcast %75 : vector<1x8x1xf32> to vector<1x8x8xf32>
      %77 = vector.extract_strided_slice %20 {offsets = [0, 3, 0], sizes = [1, 1, 1], strides = [1, 1, 1]} : vector<1x8x1xf32> to vector<1x1x1xf32>
      %78 = vector.broadcast %77 : vector<1x1x1xf32> to vector<1x8x1xf32>
      %79 = arith.mulf %20, %78 : vector<1x8x1xf32>
      %80 = vector.extract_strided_slice %27 {offsets = [0, 3, 0], sizes = [1, 1, 1], strides = [1, 1, 1]} : vector<1x8x1xf32> to vector<1x1x1xf32>
      %81 = vector.broadcast %80 : vector<1x1x1xf32> to vector<1x8x1xf32>
      %82 = arith.mulf %27, %81 : vector<1x8x1xf32>
      %83 = arith.addf %79, %82 : vector<1x8x1xf32>
      %84 = vector.extract_strided_slice %37 {offsets = [0, 3, 0], sizes = [1, 1, 1], strides = [1, 1, 1]} : vector<1x8x1xf32> to vector<1x1x1xf32>
      %85 = vector.broadcast %84 : vector<1x1x1xf32> to vector<1x8x1xf32>
      %86 = arith.mulf %37, %85 : vector<1x8x1xf32>
      %87 = arith.addf %83, %86 : vector<1x8x1xf32>
      %88 = vector.shape_cast %87 : vector<1x8x1xf32> to vector<1x8x1xf32>
      %89 = vector.broadcast %88 : vector<1x8x1xf32> to vector<1x8x8xf32>
      %90 = vector.extract_strided_slice %20 {offsets = [0, 4, 0], sizes = [1, 1, 1], strides = [1, 1, 1]} : vector<1x8x1xf32> to vector<1x1x1xf32>
      %91 = vector.broadcast %90 : vector<1x1x1xf32> to vector<1x8x1xf32>
      %92 = arith.mulf %20, %91 : vector<1x8x1xf32>
      %93 = vector.extract_strided_slice %27 {offsets = [0, 4, 0], sizes = [1, 1, 1], strides = [1, 1, 1]} : vector<1x8x1xf32> to vector<1x1x1xf32>
      %94 = vector.broadcast %93 : vector<1x1x1xf32> to vector<1x8x1xf32>
      %95 = arith.mulf %27, %94 : vector<1x8x1xf32>
      %96 = arith.addf %92, %95 : vector<1x8x1xf32>
      %97 = vector.extract_strided_slice %37 {offsets = [0, 4, 0], sizes = [1, 1, 1], strides = [1, 1, 1]} : vector<1x8x1xf32> to vector<1x1x1xf32>
      %98 = vector.broadcast %97 : vector<1x1x1xf32> to vector<1x8x1xf32>
      %99 = arith.mulf %37, %98 : vector<1x8x1xf32>
      %100 = arith.addf %96, %99 : vector<1x8x1xf32>
      %101 = vector.shape_cast %100 : vector<1x8x1xf32> to vector<1x8x1xf32>
      %102 = vector.broadcast %101 : vector<1x8x1xf32> to vector<1x8x8xf32>
      %103 = vector.extract_strided_slice %20 {offsets = [0, 5, 0], sizes = [1, 1, 1], strides = [1, 1, 1]} : vector<1x8x1xf32> to vector<1x1x1xf32>
      %104 = vector.broadcast %103 : vector<1x1x1xf32> to vector<1x8x1xf32>
      %105 = arith.mulf %20, %104 : vector<1x8x1xf32>
      %106 = vector.extract_strided_slice %27 {offsets = [0, 5, 0], sizes = [1, 1, 1], strides = [1, 1, 1]} : vector<1x8x1xf32> to vector<1x1x1xf32>
      %107 = vector.broadcast %106 : vector<1x1x1xf32> to vector<1x8x1xf32>
      %108 = arith.mulf %27, %107 : vector<1x8x1xf32>
      %109 = arith.addf %105, %108 : vector<1x8x1xf32>
      %110 = vector.extract_strided_slice %37 {offsets = [0, 5, 0], sizes = [1, 1, 1], strides = [1, 1, 1]} : vector<1x8x1xf32> to vector<1x1x1xf32>
      %111 = vector.broadcast %110 : vector<1x1x1xf32> to vector<1x8x1xf32>
      %112 = arith.mulf %37, %111 : vector<1x8x1xf32>
      %113 = arith.addf %109, %112 : vector<1x8x1xf32>
      %114 = vector.shape_cast %113 : vector<1x8x1xf32> to vector<1x8x1xf32>
      %115 = vector.broadcast %114 : vector<1x8x1xf32> to vector<1x8x8xf32>
      %116 = vector.extract_strided_slice %20 {offsets = [0, 6, 0], sizes = [1, 1, 1], strides = [1, 1, 1]} : vector<1x8x1xf32> to vector<1x1x1xf32>
      %117 = vector.broadcast %116 : vector<1x1x1xf32> to vector<1x8x1xf32>
      %118 = arith.mulf %20, %117 : vector<1x8x1xf32>
      %119 = vector.extract_strided_slice %27 {offsets = [0, 6, 0], sizes = [1, 1, 1], strides = [1, 1, 1]} : vector<1x8x1xf32> to vector<1x1x1xf32>
      %120 = vector.broadcast %119 : vector<1x1x1xf32> to vector<1x8x1xf32>
      %121 = arith.mulf %27, %120 : vector<1x8x1xf32>
      %122 = arith.addf %118, %121 : vector<1x8x1xf32>
      %123 = vector.extract_strided_slice %37 {offsets = [0, 6, 0], sizes = [1, 1, 1], strides = [1, 1, 1]} : vector<1x8x1xf32> to vector<1x1x1xf32>
      %124 = vector.broadcast %123 : vector<1x1x1xf32> to vector<1x8x1xf32>
      %125 = arith.mulf %37, %124 : vector<1x8x1xf32>
      %126 = arith.addf %122, %125 : vector<1x8x1xf32>
      %127 = vector.shape_cast %126 : vector<1x8x1xf32> to vector<1x8x1xf32>
      %128 = vector.broadcast %127 : vector<1x8x1xf32> to vector<1x8x8xf32>
      %129 = vector.extract_strided_slice %20 {offsets = [0, 7, 0], sizes = [1, 1, 1], strides = [1, 1, 1]} : vector<1x8x1xf32> to vector<1x1x1xf32>
      %130 = vector.broadcast %129 : vector<1x1x1xf32> to vector<1x8x1xf32>
      %131 = arith.mulf %20, %130 : vector<1x8x1xf32>
      %132 = vector.extract_strided_slice %27 {offsets = [0, 7, 0], sizes = [1, 1, 1], strides = [1, 1, 1]} : vector<1x8x1xf32> to vector<1x1x1xf32>
      %133 = vector.broadcast %132 : vector<1x1x1xf32> to vector<1x8x1xf32>
      %134 = arith.mulf %27, %133 : vector<1x8x1xf32>
      %135 = arith.addf %131, %134 : vector<1x8x1xf32>
      %136 = vector.extract_strided_slice %37 {offsets = [0, 7, 0], sizes = [1, 1, 1], strides = [1, 1, 1]} : vector<1x8x1xf32> to vector<1x1x1xf32>
      %137 = vector.broadcast %136 : vector<1x1x1xf32> to vector<1x8x1xf32>
      %138 = arith.mulf %37, %137 : vector<1x8x1xf32>
      %139 = arith.addf %135, %138 : vector<1x8x1xf32>
      %140 = vector.shape_cast %139 : vector<1x8x1xf32> to vector<1x8x1xf32>
      %141 = vector.broadcast %140 : vector<1x8x1xf32> to vector<1x8x8xf32>
      %142 = tpu.concatenate %50, %63, %76, %89, %102, %115, %128, %141 in 2 : vector<1x8x8xf32>, vector<1x8x8xf32>, vector<1x8x8xf32>, vector<1x8x8xf32>, vector<1x8x8xf32>, vector<1x8x8xf32>, vector<1x8x8xf32>, vector<1x8x8xf32> -> vector<1x8x64xf32>
      %143 = arith.mulf %28, %142 : vector<1x8x64xf32>
      %c0_28 = arith.constant 0 : index
      %c0_29 = arith.constant 0 : index
      %c0_30 = arith.constant 0 : index
      %144 = vector.load %arg5[%c0_28, %c0_29, %c0_30] : memref<1x8x64xf32, #tpu.memory_space<vmem>>, vector<1x8x64xf32>
      tpu.vector_store %arg5[%c0_28, %c0_29, %c0_30], %143 {strides = array<i32>} : memref<1x8x64xf32, #tpu.memory_space<vmem>>, vector<1x8x64xf32>,
    } else {
    }
    return
  }
  func.func @transform_0(%arg0: i32, %arg1: i32) -> (i32, i32, i32) {
    %c0_i32 = arith.constant 0 : i32
    %c0_i32_0 = arith.constant 0 : i32
    %c0_i32_1 = arith.constant 0 : i32
    return %arg0, %c0_i32, %c0_i32_0 : i32, i32, i32
  }
  func.func @transform_1(%arg0: i32, %arg1: i32) -> (i32, i32, i32) {
    %c0_i32 = arith.constant 0 : i32
    %c0_i32_0 = arith.constant 0 : i32
    %c0_i32_1 = arith.constant 0 : i32
    return %arg0, %c0_i32, %c0_i32_0 : i32, i32, i32
  }
  func.func @transform_2(%arg0: i32, %arg1: i32) -> (i32, i32, i32) {
    %c0_i32 = arith.constant 0 : i32
    %c0_i32_0 = arith.constant 0 : i32
    %c0_i32_1 = arith.constant 0 : i32
    return %arg0, %c0_i32, %c0_i32_0 : i32, i32, i32
  }
  func.func @transform_3(%arg0: i32, %arg1: i32) -> (i32, i32, i32) {
    %c0_i32 = arith.constant 0 : i32
    %c0_i32_0 = arith.constant 0 : i32
    %c0_i32_1 = arith.constant 0 : i32
    return %arg0, %c0_i32, %c0_i32_0 : i32, i32, i32
  }
}

</mosaic_0001>

<llo_original>
// kernel: tpu_custom_call.1
$region0: #{tpu_custom_call.1}
  #allocation0 [shape = 'u32[]', space=smem, size = 0x4, offset = 0x4, fixed_abs, tag = 'smem constant byte address 0x4 - core index']
  #allocation1 [shape = 'u32[144,128]{1,0:T(1,128)}', space=vmem, size = 0x12000, scoped, tag = 'internal scratch']
  #allocation2 [shape = 'f32[1,8,1]{2,1,0:T(8,128)}', space=vmem, size = 0x1000, scoped, tag = 'scratch operand']
  #allocation3 [shape = 'f32[1,8,1]{2,1,0:T(8,128)}', space=vmem, size = 0x1000, scoped, tag = 'scratch operand']
  #allocation4 [shape = 'f32[1,8,1]{2,1,0:T(8,128)}', space=vmem, size = 0x1000, scoped, tag = 'scratch operand']
  #allocation5 [shape = 'f32[1,8,1]{2,1,0:T(8,128)}', space=vmem, size = 0x1000, scoped, tag = 'scratch operand']
  %s0 = inlined_call_operand.hbm [shape: f32[2,8,1024], index: 0, kind: input, shape index: {}]
  %s1 = inlined_call_operand.hbm [shape: f32[2,8,256], index: 1, kind: input, shape index: {}]
  %s2 = inlined_call_operand.hbm [shape: f32[2,8,64], index: 2, kind: input, shape index: {}]
  %s3 = inlined_call_operand.hbm [shape: f32[2,8,64], index: 3, kind: output, shape index: {}]
  %s4 = sld [smem:[#allocation0]]
  $region73: #{tpu_custom_call.1} parent=0
    _
  %s6 = ssub.s32 1, %s4
  %s7 = scalar_select 0, %s6, %s4
  $region1: #{tpu_custom_call.1} parent=0
    #allocation6 [shape = 'u8[65536]{0}', space=vmem, size = 0x10000, scoped, tag = 'input window, operand 0']
    #allocation7 [shape = 's32[2]{0}', space=sflag, size = 0x8, scoped, tag = 'scoped memory for tpu_custom_call.1']
    #allocation8 [shape = 's32[2]{0}', space=sflag, size = 0x8, scoped, tag = 'scoped memory for tpu_custom_call.1']
    #allocation9 [shape = 'u8[16384]{0}', space=vmem, size = 0x4000, scoped, tag = 'input window, operand 1']
    #allocation10 [shape = 's32[2]{0}', space=sflag, size = 0x8, scoped, tag = 'scoped memory for tpu_custom_call.1']
    #allocation11 [shape = 'u8[8192]{0}', space=vmem, size = 0x2000, scoped, tag = 'input window, operand 2']
    #allocation12 [shape = 'u8[8192]{0}', space=vmem, size = 0x2000, scoped, tag = 'output window, operand 0']
    %8 = vsyncpa [#allocation7], 0
    %s9 = scalar_lea.sflag [#allocation7], 1
    %10 = vsyncpa %s9, 0
    %11 = vsyncpa [#allocation10], 0
    %s12 = scalar_lea.sflag [#allocation10], 1
    %13 = vsyncpa %s12, 0
    %14 = vsyncpa [#allocation8], 0
    %s15 = scalar_lea.sflag [#allocation8], 1
    %16 = vsyncpa %s15, 0
    loop: start=0, step=1, limit=4
    $region2: #{tpu_custom_call.1} parent=1 // loop_pre_header
      _
    $region3: #{tpu_custom_call.1} parent=1 // loop_header
      %s18 = sphi 0, %s22
      %p19 = scmp.ge.s32.totalorder %s18, 4
      %s25 = sphi 0, %s37
      %s26 = sphi 0, %s33
      %s27 = sphi 0, %s25
      %s28 = sphi 0, %s26
      %s29 = sphi 0, %s27
      %s30 = sphi 0, %s28
      %s40 = sphi 0, %s42
      %s43 = sphi 0, %s40
      %s44 = sphi 0, %s43
      %s60 = sphi 0, %s44
      %s66 = sphi 0, %s68
      %s69 = sphi 0, %s66
      %s70 = sphi 0, %s69
      %s86 = sphi 0, %s70
      %s92 = sphi 0, %s94
      %s95 = sphi 0, %s92
      %s96 = sphi 0, %s95
      %s112 = sphi 0, %s96
      %s118 = sphi 0, %s120
      %s121 = sphi 0, %s118
      %s122 = sphi 0, %s121
      %s138 = sphi 0, %s122
    $region4: #{tpu_custom_call.1} parent=1 // loop_header_branch
      %21 = sbr.rel (%p19) target = $region8
    $region5: #{tpu_custom_call.1} parent=1 // loop_body
      %s23 = ssub.s32 %s18, 1
      %s24 = ssub.s32 %s18, 2
      %s31 = sadd.s32 1, %s26
      %p32 = scmp.ge.s32.totalorder %s31, 1
      %s33 = scalar_select %p32, 0, %s31
      %s34 = sadd.s32 1, %s25
      %s35 = scalar_select %p32, %s34, %s25
      %p36 = scmp.ge.s32.totalorder %s35, 2
      %s37 = scalar_select %p36, 0, %s35
      %s38 = ssub.s32 %s25, %s37
      %p39 = scmp.eq.s32.totalorder %s38, 0
      %s41 = sadd.s32 %s40, 1
      %s42 = scalar_select %p39, %s40, %s41
      %p45 = pneg %p39
      %p46 = scmp.eq.s32.totalorder %s18, 1
      %p47 = por %p45, %p46
      %p48 = scmp.ne.s32.totalorder %s40, %s43
      %p49 = scmp.eq.s32.totalorder %s18, 0
      %p50 = por %p48, %p49
      %p51 = scmp.ne.s32.totalorder %s40, %s43
      %p52 = scmp.eq.s32.totalorder %s23, 1
      %p53 = por %p51, %p52
      %p54 = scmp.ne.s32.totalorder %s43, %s44
      %p55 = scmp.eq.s32.totalorder %s23, 0
      %p56 = por %p54, %p55
      %p57 = scmp.ne.s32.totalorder %s43, %s44
      %p58 = scmp.eq.s32.totalorder %s24, 1
      %p59 = por %p57, %p58
      %p61 = scmp.ne.s32.totalorder %s44, %s60
      %p62 = scmp.eq.s32.totalorder %s24, 0
      %p63 = por %p61, %p62
      %s64 = ssub.s32 %s25, %s37
      %p65 = scmp.eq.s32.totalorder %s64, 0
      %s67 = sadd.s32 %s66, 1
      %s68 = scalar_select %p65, %s66, %s67
      %p71 = pneg %p65
      %p72 = scmp.eq.s32.totalorder %s18, 1
      %p73 = por %p71, %p72
      %p74 = scmp.ne.s32.totalorder %s66, %s69
      %p75 = scmp.eq.s32.totalorder %s18, 0
      %p76 = por %p74, %p75
      %p77 = scmp.ne.s32.totalorder %s66, %s69
      %p78 = scmp.eq.s32.totalorder %s23, 1
      %p79 = por %p77, %p78
      %p80 = scmp.ne.s32.totalorder %s69, %s70
      %p81 = scmp.eq.s32.totalorder %s23, 0
      %p82 = por %p80, %p81
      %p83 = scmp.ne.s32.totalorder %s69, %s70
      %p84 = scmp.eq.s32.totalorder %s24, 1
      %p85 = por %p83, %p84
      %p87 = scmp.ne.s32.totalorder %s70, %s86
      %p88 = scmp.eq.s32.totalorder %s24, 0
      %p89 = por %p87, %p88
      %s90 = ssub.s32 %s25, %s37
      %p91 = scmp.eq.s32.totalorder %s90, 0
      %s93 = sadd.s32 %s92, 1
      %s94 = scalar_select %p91, %s92, %s93
      %p97 = pneg %p91
      %p98 = scmp.eq.s32.totalorder %s18, 1
      %p99 = por %p97, %p98
      %p100 = scmp.ne.s32.totalorder %s92, %s95
      %p101 = scmp.eq.s32.totalorder %s18, 0
      %p102 = por %p100, %p101
      %p103 = scmp.ne.s32.totalorder %s92, %s95
      %p104 = scmp.eq.s32.totalorder %s23, 1
      %p105 = por %p103, %p104
      %p106 = scmp.ne.s32.totalorder %s95, %s96
      %p107 = scmp.eq.s32.totalorder %s23, 0
      %p108 = por %p106, %p107
      %p109 = scmp.ne.s32.totalorder %s95, %s96
      %p110 = scmp.eq.s32.totalorder %s24, 1
      %p111 = por %p109, %p110
      %p113 = scmp.ne.s32.totalorder %s96, %s112
      %p114 = scmp.eq.s32.totalorder %s24, 0
      %p115 = por %p113, %p114
      %s116 = ssub.s32 %s25, %s37
      %p117 = scmp.eq.s32.totalorder %s116, 0
      %s119 = sadd.s32 %s118, 1
      %s120 = scalar_select %p117, %s118, %s119
      %p123 = pneg %p117
      %p124 = scmp.eq.s32.totalorder %s18, 1
      %p125 = por %p123, %p124
      %p126 = scmp.ne.s32.totalorder %s118, %s121
      %p127 = scmp.eq.s32.totalorder %s18, 0
      %p128 = por %p126, %p127
      %p129 = scmp.ne.s32.totalorder %s118, %s121
      %p130 = scmp.eq.s32.totalorder %s23, 1
      %p131 = por %p129, %p130
      %p132 = scmp.ne.s32.totalorder %s121, %s122
      %p133 = scmp.eq.s32.totalorder %s23, 0
      %p134 = por %p132, %p133
      %p135 = scmp.ne.s32.totalorder %s121, %s122
      %p136 = scmp.eq.s32.totalorder %s24, 1
      %p137 = por %p135, %p136
      %p139 = scmp.ne.s32.totalorder %s122, %s138
      %p140 = scmp.eq.s32.totalorder %s24, 0
      %p141 = por %p139, %p140
      %p142 = scmp.le.s32.totalorder 1, %s18
      %p143 = scmp.lt.s32.totalorder %s18, 3
      %p144 = pnand %p142, %p143
      %p145 = pneg %p144
      // Predicated region
      $region9: #{tpu_custom_call.1} parent=5 // pred_check
        _
      $region10: #{tpu_custom_call.1} parent=5 // pred_check_branch
        %147 = sbr.rel (%p144) target = $region12
      $region11: #{tpu_custom_call.1} parent=5 // pred_region
        %s148 = ssub.s32 %s18, 1
      $region12: #{tpu_custom_call.1} parent=5 // pred_fallthru
        _
      %p149 = scmp.lt.s32.totalorder %s18, 2
      // Predicated region
      $region13: #{tpu_custom_call.1} parent=5 // pred_check
        %p150 = pneg %p149
      $region14: #{tpu_custom_call.1} parent=5 // pred_check_branch
        %152 = sbr.rel (%p150) target = $region16
      $region15: #{tpu_custom_call.1} parent=5 // pred_region
        // Predicated region
        $region17: #{tpu_custom_call.1} parent=15 // pred_check
          %p153 = pneg %p50
        $region18: #{tpu_custom_call.1} parent=15 // pred_check_branch
          %155 = sbr.rel (%p153) target = $region20
        $region19: #{tpu_custom_call.1} parent=15 // pred_region
          %s156 = sand.u32 %s40, 1
          %s157 = scalar_lea.sflag [#allocation7], %s156
          %s158 = sand.u32 %s40, 1
          %s159 = smul.addr %s158, 64
          %s160 = scalar_lea.vmem [#allocation6], %s159
          %s162 = ssub.s32 1024, 1024
          %163 = vsyncadd %s157, %s162
          %s164 = smul.addr %s25, 8
          %s165 = smul.addr %s164, 128
          %s166 = scalar_lea.hbm %s0, %s165
          %s168 = sshll.u32 %s160, 4
          %s169 = int_to_ptr.vmem [resolvable:$true] %s168
          %171 = dma.hbm_to_vmem [thread:$0]  %s166, 1024, %s169, %s157
        $region20: #{tpu_custom_call.1} parent=15 // pred_fallthru
          _
        // Predicated region
        $region21: #{tpu_custom_call.1} parent=15 // pred_check
          %p172 = pneg %p76
        $region22: #{tpu_custom_call.1} parent=15 // pred_check_branch
          %174 = sbr.rel (%p172) target = $region24
        $region23: #{tpu_custom_call.1} parent=15 // pred_region
          %s175 = sand.u32 %s18, 1
          %s176 = scalar_lea.sflag [#allocation10], %s175
          %s177 = sand.u32 %s66, 1
          %s178 = smul.addr %s177, 16
          %s179 = scalar_lea.vmem [#allocation9], %s178
          %s181 = ssub.s32 256, 256
          %182 = vsyncadd %s176, %s181
          %s183 = smul.addr %s25, 2
          %s184 = smul.addr %s183, 128
          %s185 = scalar_lea.hbm %s1, %s184
          %s187 = sshll.u32 %s179, 4
          %s188 = int_to_ptr.vmem [resolvable:$true] %s187
          %190 = dma.hbm_to_vmem [thread:$0]  %s185, 256, %s188, %s176
        $region24: #{tpu_custom_call.1} parent=15 // pred_fallthru
          _
        // Predicated region
        $region25: #{tpu_custom_call.1} parent=15 // pred_check
          %p191 = pneg %p102
        $region26: #{tpu_custom_call.1} parent=15 // pred_check_branch
          %193 = sbr.rel (%p191) target = $region28
        $region27: #{tpu_custom_call.1} parent=15 // pred_region
          %s194 = sand.u32 %s18, 1
          %s195 = scalar_lea.sflag [#allocation10], %s194
          %s196 = sand.u32 %s92, 1
          %s197 = smul.addr %s196, 8
          %s198 = scalar_lea.vmem [#allocation11], %s197
          %s200 = ssub.s32 128, 128
          %201 = vsyncadd %s195, %s200
          %s202 = smul.addr %s25, 128
          %s203 = scalar_lea.hbm %s2, %s202
          %s205 = sshll.u32 %s198, 4
          %s206 = int_to_ptr.vmem [resolvable:$true] %s205
          %208 = dma.hbm_to_vmem [thread:$0]  %s203, 128, %s206, %s195
        $region28: #{tpu_custom_call.1} parent=15 // pred_fallthru
          _
      $region16: #{tpu_custom_call.1} parent=5 // pred_fallthru
        _
      %p209 = scmp.le.s32.totalorder 1, %s18
      %p210 = scmp.lt.s32.totalorder %s18, 3
      %p211 = pnand %p209, %p210
      %p212 = pneg %p211
      // Predicated region
      $region29: #{tpu_custom_call.1} parent=5 // pred_check
        _
      $region30: #{tpu_custom_call.1} parent=5 // pred_check_branch
        %214 = sbr.rel (%p211) target = $region32
      $region31: #{tpu_custom_call.1} parent=5 // pred_region
        %s215 = ssub.s32 %s18, 1
        %s216 = sand.u32 %s43, 1
        %s217 = scalar_lea.sflag [#allocation7], %s216
        %s218 = sand.u32 %s43, 1
        %s219 = smul.addr %s218, 64
        %s220 = scalar_lea.vmem [#allocation6], %s219
        // Predicated region
        $region33: #{tpu_custom_call.1} parent=31 // pred_check
          %p221 = pneg %p56
        $region34: #{tpu_custom_call.1} parent=31 // pred_check_branch
          %223 = sbr.rel (%p221) target = $region36
        $region35: #{tpu_custom_call.1} parent=31 // pred_region
          %224 = dma.done %s217, 1024
        $region36: #{tpu_custom_call.1} parent=31 // pred_fallthru
          _
        %s225 = sand.u32 %s23, 1
        %s226 = scalar_lea.sflag [#allocation10], %s225
        %s227 = sand.u32 %s69, 1
        %s228 = smul.addr %s227, 16
        %s229 = scalar_lea.vmem [#allocation9], %s228
        // Predicated region
        $region37: #{tpu_custom_call.1} parent=31 // pred_check
          %p230 = pneg %p82
        $region38: #{tpu_custom_call.1} parent=31 // pred_check_branch
          %232 = sbr.rel (%p230) target = $region40
        $region39: #{tpu_custom_call.1} parent=31 // pred_region
          %233 = dma.done %s226, 256
        $region40: #{tpu_custom_call.1} parent=31 // pred_fallthru
          _
        %s234 = sand.u32 %s23, 1
        %s235 = scalar_lea.sflag [#allocation10], %s234
        %s236 = sand.u32 %s95, 1
        %s237 = smul.addr %s236, 8
        %s238 = scalar_lea.vmem [#allocation11], %s237
        // Predicated region
        $region41: #{tpu_custom_call.1} parent=31 // pred_check
          %p239 = pneg %p108
        $region42: #{tpu_custom_call.1} parent=31 // pred_check_branch
          %241 = sbr.rel (%p239) target = $region44
        $region43: #{tpu_custom_call.1} parent=31 // pred_region
          %242 = dma.done %s235, 128
        $region44: #{tpu_custom_call.1} parent=31 // pred_fallthru
          _
        %s243 = sand.u32 %s43, 1
        %s244 = scalar_lea.sflag [#allocation7], %s243
        %s245 = sand.u32 %s43, 1
        %s246 = smul.addr %s245, 64
        %s247 = scalar_lea.vmem [#allocation6], %s246
        %p248 = pneg %p56
        %p249 = pneg %p53
        %s250 = sand.u32 %s23, 1
        %s251 = scalar_lea.sflag [#allocation10], %s250
        %s252 = sand.u32 %s69, 1
        %s253 = smul.addr %s252, 16
        %s254 = scalar_lea.vmem [#allocation9], %s253
        %p255 = pneg %p82
        %p256 = pneg %p79
        %s257 = sand.u32 %s23, 1
        %s258 = scalar_lea.sflag [#allocation10], %s257
        %s259 = sand.u32 %s95, 1
        %s260 = smul.addr %s259, 8
        %s261 = scalar_lea.vmem [#allocation11], %s260
        %p262 = pneg %p108
        %p263 = pneg %p105
        %p264 = pneg %p134
        %p265 = pneg %p131
        %s266 = sand.u32 %s121, 1
        %s267 = scalar_lea.sflag [#allocation8], %s266
        %s268 = sand.u32 %s121, 1
        %s269 = smul.addr %s268, 8
        %s270 = scalar_lea.vmem [#allocation12], %s269
        %p271 = scmp.eq.s32.totalorder %s28, 0
        // Predicated region
        $region45: #{tpu_custom_call.1} parent=31 // pred_check
          %p272 = pneg %p271
        $region46: #{tpu_custom_call.1} parent=31 // pred_check_branch
          %274 = sbr.rel (%p272) target = $region48
        $region47: #{tpu_custom_call.1} parent=31 // pred_region
          %vm275 = vcmask 7168
          %276 = vst.msk [vmem:[#allocation2] sm:$0xff] %vm275, -inf
          %277 = vst.msk [vmem:[#allocation3] sm:$0xff] %vm275, 0.0
          %278 = vst.msk [vmem:[#allocation4] sm:$0xff] %vm275, -inf
          %279 = vst.msk [vmem:[#allocation5] sm:$0xff] %vm275, 0.0
        $region48: #{tpu_custom_call.1} parent=31 // pred_fallthru
          _
        %s280 = smul.u32 %s28, 1024
        %p281 = scmp.lt.s32.totalorder %s280, 1024
        // Predicated region
        $region49: #{tpu_custom_call.1} parent=31 // pred_check
          %p282 = pneg %p281
        $region50: #{tpu_custom_call.1} parent=31 // pred_check_branch
          %284 = sbr.rel (%p282) target = $region52
        $region51: #{tpu_custom_call.1} parent=31 // pred_region
          %v285 = vld [vmem:[%s220] sm:$0xff]
          %v286 = vld [vmem:[%s220 + $0x8] sm:$0xff]
          %v287 = vld [vmem:[%s220 + $0x10] sm:$0xff]
          %v288 = vld [vmem:[%s220 + $0x18] sm:$0xff]
          %v289 = vld [vmem:[%s220 + $0x20] sm:$0xff]
          %v290 = vld [vmem:[%s220 + $0x28] sm:$0xff]
          %v291 = vld [vmem:[%s220 + $0x30] sm:$0xff]
          %v292 = vld [vmem:[%s220 + $0x38] sm:$0xff]
          %v293 = vld [vmem:[#allocation2] sm:$0xff]
          %v294 = vmax.f32 %v285, %v289
          %v295 = vmax.f32 %v286, %v290
          %v296 = vmax.f32 %v287, %v291
          %v297 = vmax.f32 %v288, %v292
          %v298 = vmax.f32 %v294, %v295
          %v299 = vmax.f32 %v296, %v297
          %v300 = vmax.f32 %v298, %v299
          %301 = vmax.xlane.f32.xlu0 %v300
          %v302 = vpop.xlane.xlu0 %301
          %v303 = vmax.f32 %v293, %v302
          %vm304 = vcmask 7168
          %305 = vst.msk [vmem:[#allocation2] sm:$0xff] %vm304, %v303
          %v306 = vld [vmem:[#allocation3] sm:$0xff]
          %v307 = vadd.f32 %v285, %v286
          %v308 = vadd.f32 %v307, %v287
          %v309 = vadd.f32 %v308, %v288
          %v310 = vadd.f32 %v309, %v289
          %v311 = vadd.f32 %v310, %v290
          %v312 = vadd.f32 %v311, %v291
          %v313 = vadd.f32 %v312, %v292
          %314 = vadd.xlane.f32.xlu0 %v313
          %v315 = vpop.xlane.xlu0 %314
          %v316 = vadd.f32 %v306, %v315
          %317 = vst.msk [vmem:[#allocation3] sm:$0xff] %vm304, %v316
        $region52: #{tpu_custom_call.1} parent=31 // pred_fallthru
          _
        %s318 = smul.u32 %s28, 256
        %p319 = scmp.lt.s32.totalorder %s318, 256
        // Predicated region
        $region53: #{tpu_custom_call.1} parent=31 // pred_check
          %p320 = pneg %p319
        $region54: #{tpu_custom_call.1} parent=31 // pred_check_branch
          %322 = sbr.rel (%p320) target = $region56
        $region55: #{tpu_custom_call.1} parent=31 // pred_region
          %v323 = vld [vmem:[%s229] sm:$0xff]
          %v324 = vld [vmem:[%s229 + $0x8] sm:$0xff]
          %v325 = vld [vmem:[#allocation4] sm:$0xff]
          %v326 = vmax.f32 %v323, %v324
          %327 = vmax.xlane.f32.xlu0 %v326
          %v328 = vpop.xlane.xlu0 %327
          %v329 = vmax.f32 %v325, %v328
          %vm330 = vcmask 7168
          %331 = vst.msk [vmem:[#allocation4] sm:$0xff] %vm330, %v329
          %v332 = vld [vmem:[#allocation5] sm:$0xff]
          %v333 = vadd.f32 %v323, %v324
          %334 = vadd.xlane.f32.xlu0 %v333
          %v335 = vpop.xlane.xlu0 %334
          %v336 = vadd.f32 %v332, %v335
          %337 = vst.msk [vmem:[#allocation5] sm:$0xff] %vm330, %v336
        $region56: #{tpu_custom_call.1} parent=31 // pred_fallthru
          _
        // Predicated region
        $region57: #{tpu_custom_call.1} parent=31 // pred_check
          %p338 = pneg %p271
        $region58: #{tpu_custom_call.1} parent=31 // pred_check_branch
          %340 = sbr.rel (%p338) target = $region60
        $region59: #{tpu_custom_call.1} parent=31 // pred_region
          %v341 = vld [vmem:[#allocation2] sm:$0xff]
          %v342 = vld [vmem:[#allocation3] sm:$0xff]
          %v343 = vmul.f32 %v342, 0.0009765625
          %v344 = vadd.f32 %v341, %v343
          %v345 = vmul.f32 %v344, 0.5
          %v346 = vld [vmem:[#allocation4] sm:$0xff]
          %v347 = vld [vmem:[#allocation5] sm:$0xff]
          %v348 = vmul.f32 %v347, 0.00390625
          %v349 = vadd.f32 %v346, %v348
          %v350 = vmul.f32 %v349, 0.5
          %v351 = vld [vmem:[%s238] sm:$0xff]
          %vm352 = vcmask 523264
          %v353 = vsel %vm352, %v351, -inf
          %354 = vmax.xlane.f32.xlu0 %v353
          %v355 = vpop.xlane.xlu0 %354
          %v356 = vsel %vm352, %v351, 0.0
          %357 = vadd.xlane.f32.xlu0 %v356
          %v358 = vpop.xlane.xlu0 %357
          %v359 = vmul.f32 %v358, 0.015625
          %v360 = vadd.f32 %v355, %v359
          %v361 = vmul.f32 %v360, 0.5
          %v362 = vlaneseq
          %v363 = vshrl.u32 %v362, 7
          %v364 = vsub.s32 0, %v363
          %v365 = vrot.slane %v345, %v364
          %v366 = vmul.f32 %v345, %v365
          %v367 = vlaneseq
          %v368 = vshrl.u32 %v367, 7
          %v369 = vsub.s32 0, %v368
          %v370 = vrot.slane %v350, %v369
          %v371 = vmul.f32 %v350, %v370
          %v372 = vadd.f32 %v366, %v371
          %v373 = vlaneseq
          %v374 = vshrl.u32 %v373, 7
          %v375 = vsub.s32 0, %v374
          %v376 = vrot.slane %v361, %v375
          %v377 = vmul.f32 %v361, %v376
          %v378 = vadd.f32 %v372, %v377
          %380 = vset.pattern.permute.xlu0 0
          %381 = vperm.xlu0 %380, %v378
          %v382 = vpop.permute.xlu0 %381
          %v384 = vlaneseq
          %v385 = vshrl.u32 %v384, 7
          %v386 = vsub.s32 1, %v385
          %v387 = vrot.slane %v345, %v386
          %v388 = vmul.f32 %v345, %v387
          %v389 = vlaneseq
          %v390 = vshrl.u32 %v389, 7
          %v391 = vsub.s32 1, %v390
          %v392 = vrot.slane %v350, %v391
          %v393 = vmul.f32 %v350, %v392
          %v394 = vadd.f32 %v388, %v393
          %v395 = vlaneseq
          %v396 = vshrl.u32 %v395, 7
          %v397 = vsub.s32 1, %v396
          %v398 = vrot.slane %v361, %v397
          %v399 = vmul.f32 %v361, %v398
          %v400 = vadd.f32 %v394, %v399
          %402 = vset.pattern.permute.xlu0 0
          %403 = vperm.xlu0 %402, %v400
          %v404 = vpop.permute.xlu0 %403
          %v406 = vlaneseq
          %v407 = vshrl.u32 %v406, 7
          %v408 = vsub.s32 2, %v407
          %v409 = vrot.slane %v345, %v408
          %v410 = vmul.f32 %v345, %v409
          %v411 = vlaneseq
          %v412 = vshrl.u32 %v411, 7
          %v413 = vsub.s32 2, %v412
          %v414 = vrot.slane %v350, %v413
          %v415 = vmul.f32 %v350, %v414
          %v416 = vadd.f32 %v410, %v415
          %v417 = vlaneseq
          %v418 = vshrl.u32 %v417, 7
          %v419 = vsub.s32 2, %v418
          %v420 = vrot.slane %v361, %v419
          %v421 = vmul.f32 %v361, %v420
          %v422 = vadd.f32 %v416, %v421
          %424 = vset.pattern.permute.xlu0 0
          %425 = vperm.xlu0 %424, %v422
          %v426 = vpop.permute.xlu0 %425
          %v428 = vlaneseq
          %v429 = vshrl.u32 %v428, 7
          %v430 = vsub.s32 3, %v429
          %v431 = vrot.slane %v345, %v430
          %v432 = vmul.f32 %v345, %v431
          %v433 = vlaneseq
          %v434 = vshrl.u32 %v433, 7
          %v435 = vsub.s32 3, %v434
          %v436 = vrot.slane %v350, %v435
          %v437 = vmul.f32 %v350, %v436
          %v438 = vadd.f32 %v432, %v437
          %v439 = vlaneseq
          %v440 = vshrl.u32 %v439, 7
          %v441 = vsub.s32 3, %v440
          %v442 = vrot.slane %v361, %v441
          %v443 = vmul.f32 %v361, %v442
          %v444 = vadd.f32 %v438, %v443
          %446 = vset.pattern.permute.xlu0 0
          %447 = vperm.xlu0 %446, %v444
          %v448 = vpop.permute.xlu0 %447
          %v450 = vlaneseq
          %v451 = vshrl.u32 %v450, 7
          %v452 = vsub.s32 4, %v451
          %v453 = vrot.slane %v345, %v452
          %v454 = vmul.f32 %v345, %v453
          %v455 = vlaneseq
          %v456 = vshrl.u32 %v455, 7
          %v457 = vsub.s32 4, %v456
          %v458 = vrot.slane %v350, %v457
          %v459 = vmul.f32 %v350, %v458
          %v460 = vadd.f32 %v454, %v459
          %v461 = vlaneseq
          %v462 = vshrl.u32 %v461, 7
          %v463 = vsub.s32 4, %v462
          %v464 = vrot.slane %v361, %v463
          %v465 = vmul.f32 %v361, %v464
          %v466 = vadd.f32 %v460, %v465
          %468 = vset.pattern.permute.xlu0 0
          %469 = vperm.xlu0 %468, %v466
          %v470 = vpop.permute.xlu0 %469
          %v472 = vlaneseq
          %v473 = vshrl.u32 %v472, 7
          %v474 = vsub.s32 5, %v473
          %v475 = vrot.slane %v345, %v474
          %v476 = vmul.f32 %v345, %v475
          %v477 = vlaneseq
          %v478 = vshrl.u32 %v477, 7
          %v479 = vsub.s32 5, %v478
          %v480 = vrot.slane %v350, %v479
          %v481 = vmul.f32 %v350, %v480
          %v482 = vadd.f32 %v476, %v481
          %v483 = vlaneseq
          %v484 = vshrl.u32 %v483, 7
          %v485 = vsub.s32 5, %v484
          %v486 = vrot.slane %v361, %v485
          %v487 = vmul.f32 %v361, %v486
          %v488 = vadd.f32 %v482, %v487
          %490 = vset.pattern.permute.xlu0 0
          %491 = vperm.xlu0 %490, %v488
          %v492 = vpop.permute.xlu0 %491
          %v494 = vlaneseq
          %v495 = vshrl.u32 %v494, 7
          %v496 = vsub.s32 6, %v495
          %v497 = vrot.slane %v345, %v496
          %v498 = vmul.f32 %v345, %v497
          %v499 = vlaneseq
          %v500 = vshrl.u32 %v499, 7
          %v501 = vsub.s32 6, %v500
          %v502 = vrot.slane %v350, %v501
          %v503 = vmul.f32 %v350, %v502
          %v504 = vadd.f32 %v498, %v503
          %v505 = vlaneseq
          %v506 = vshrl.u32 %v505, 7
          %v507 = vsub.s32 6, %v506
          %v508 = vrot.slane %v361, %v507
          %v509 = vmul.f32 %v361, %v508
          %v510 = vadd.f32 %v504, %v509
          %512 = vset.pattern.permute.xlu0 0
          %513 = vperm.xlu0 %512, %v510
          %v514 = vpop.permute.xlu0 %513
          %v516 = vlaneseq
          %v517 = vshrl.u32 %v516, 7
          %v518 = vsub.s32 7, %v517
          %v519 = vrot.slane %v345, %v518
          %v520 = vmul.f32 %v345, %v519
          %v521 = vlaneseq
          %v522 = vshrl.u32 %v521, 7
          %v523 = vsub.s32 7, %v522
          %v524 = vrot.slane %v350, %v523
          %v525 = vmul.f32 %v350, %v524
          %v526 = vadd.f32 %v520, %v525
          %v527 = vlaneseq
          %v528 = vshrl.u32 %v527, 7
          %v529 = vsub.s32 7, %v528
          %v530 = vrot.slane %v361, %v529
          %v531 = vmul.f32 %v361, %v530
          %v532 = vadd.f32 %v526, %v531
          %534 = vset.pattern.permute.xlu0 0
          %535 = vperm.xlu0 %534, %v532
          %v536 = vpop.permute.xlu0 %535
          %vm538 = vcmask 64512
          %v539 = vsel %vm538, %v382, %v404
          %vm540 = vcmask 130048
          %v541 = vsel %vm540, %v539, %v426
          %vm542 = vcmask 195584
          %v543 = vsel %vm542, %v541, %v448
          %vm544 = vcmask 261120
          %v545 = vsel %vm544, %v543, %v470
          %vm546 = vcmask 326656
          %v547 = vsel %vm546, %v545, %v492
          %vm548 = vcmask 392192
          %v549 = vsel %vm548, %v547, %v514
          %vm550 = vcmask 457728
          %v551 = vsel %vm550, %v549, %v536
          %v552 = vmul.f32 %v351, %v551
          %553 = vst.msk [vmem:[%s270] sm:$0xff] %vm352, %v552
        $region60: #{tpu_custom_call.1} parent=31 // pred_fallthru
          _
        %s554 = sand.u32 %s121, 1
        %s555 = scalar_lea.sflag [#allocation8], %s554
        %s556 = sand.u32 %s121, 1
        %s557 = smul.addr %s556, 8
        %s558 = scalar_lea.vmem [#allocation12], %s557
        // Predicated region
        $region61: #{tpu_custom_call.1} parent=31 // pred_check
          %p559 = pneg %p131
        $region62: #{tpu_custom_call.1} parent=31 // pred_check_branch
          %561 = sbr.rel (%p559) target = $region64
        $region63: #{tpu_custom_call.1} parent=31 // pred_region
          %s563 = ssub.s32 128, 128
          %564 = vsyncadd %s555, %s563
          %s565 = smul.addr %s27, 128
          %s566 = scalar_lea.hbm %s3, %s565
          %s568 = sshll.u32 %s558, 4
          %s569 = int_to_ptr.vmem [resolvable:$true] %s568
          %571 = dma.vmem_to_hbm [thread:$0]  %s569, 128, %s566, %s555
        $region64: #{tpu_custom_call.1} parent=31 // pred_fallthru
          _
      $region32: #{tpu_custom_call.1} parent=5 // pred_fallthru
        _
      %p572 = scmp.le.s32.totalorder 2, %s18
      // Predicated region
      $region65: #{tpu_custom_call.1} parent=5 // pred_check
        %p573 = pneg %p572
      $region66: #{tpu_custom_call.1} parent=5 // pred_check_branch
        %575 = sbr.rel (%p573) target = $region68
      $region67: #{tpu_custom_call.1} parent=5 // pred_region
        %s576 = ssub.s32 %s18, 2
        // Predicated region
        $region69: #{tpu_custom_call.1} parent=67 // pred_check
          %p577 = pneg %p137
        $region70: #{tpu_custom_call.1} parent=67 // pred_check_branch
          %579 = sbr.rel (%p577) target = $region72
        $region71: #{tpu_custom_call.1} parent=67 // pred_region
          %s580 = sand.u32 %s122, 1
          %s581 = scalar_lea.sflag [#allocation8], %s580
          %s582 = sand.u32 %s122, 1
          %s583 = smul.addr %s582, 8
          %s584 = scalar_lea.vmem [#allocation12], %s583
          %585 = dma.done %s581, 128
        $region72: #{tpu_custom_call.1} parent=67 // pred_fallthru
          _
      $region68: #{tpu_custom_call.1} parent=5 // pred_fallthru
        _
    $region6: #{tpu_custom_call.1} parent=1 // loop_footer
      %s22 = sadd.s32 1, %s18
    $region7: #{tpu_custom_call.1} parent=1 // loop_footer_branch
      %17 = sbr.rel target = $region3
    $region8: #{tpu_custom_call.1} parent=1 // loop_exit
      _
    %586 = vsyncpa [#allocation7], 1
    %s587 = scalar_lea.sflag [#allocation7], 1
    %588 = vsyncpa %s587, 1
    %589 = vsyncpa [#allocation10], 1
    %s590 = scalar_lea.sflag [#allocation10], 1
    %591 = vsyncpa %s590, 1
    %592 = vsyncpa [#allocation8], 1
    %s593 = scalar_lea.sflag [#allocation8], 1
    %594 = vsyncpa %s593, 1

</llo_original>
